<compile_context>
chip_gen: v7x
topology: tpu7x:2x2x1
jax: 0.10.0
libtpu: 0.0.40
codegen_flags: <defaults>
</compile_context>

<pallas_src>
import jax
import jax.numpy as jnp
from jax.experimental import pallas as pl
from jax.experimental.pallas import tpu as pltpu


# --------------------------------------------------------------------------- #
# Kernel
# --------------------------------------------------------------------------- #
def _make_generator_kernel(compute_dtype):
    def kernel(u1_ref, u2_ref, u3_ref, u4_ref, w1_ref, b1_ref, w2_ref, b2_ref,
               out_ref):
        def part(u_ref, k):
            # (block_b, N) @ (N, 5H) -> f32 (block_b, 5H); K is tiny but the
            # whole pass stays on the MXU.
            return jnp.dot(u_ref[...].astype(compute_dtype), w1_ref[k],
                           preferred_element_type=jnp.float32)

        acc = part(u1_ref, 0) + part(u2_ref, 1) + part(u3_ref, 2) + part(u4_ref, 3)
        h = jnp.maximum(acc + b1_ref[...], 0.0)          # (block_b, 5H)
        # out = h @ (W2_packed @ M) + (b2_packed @ M) -> (block_b, 5) = [X,Y,Z,W,V]
        out_ref[...] = (
            jnp.dot(h, w2_ref[...], preferred_element_type=jnp.float32)
            + b2_ref[...]
        ).astype(out_ref.dtype)

    return kernel


# --------------------------------------------------------------------------- #
# Host-side packing
# --------------------------------------------------------------------------- #
def pack_generator_params(params, compute_dtype=jnp.float32):
    """Packs the 5 MLPs + theta mixing into (W1_stack, b1, W2_final, b2_final).

    W1_stack: (4, N, 5H) — one first-layer block per noise input u1..u4.
              Column blocks are [Gz, Gx, Gw, Gv, Gy]; Gv (which consumes
              cat(u2, u3)) is split across the u2 / u3 blocks.
    b1:       (1, 5H)
    W2_final: (5H, 5) = blockdiag(Gz2, Gx2, Gw2, Gv2, Gy2) @ M
    b2_final: (1, 5)  = [zb2, xb2, wb2, vb2, yb2] @ M
    """
    zw1, zb1, zw2, zb2 = params["Gz"]
    xw1, xb1, xw2, xb2 = params["Gx"]
    ww1, wb1, ww2, wb2 = params["Gw"]
    vw1, vb1, vw2, vb2 = params["Gv"]
    yw1, yb1, yw2, yb2 = params["Gy"]

    N = zw1.shape[0]          # noise_size
    H = zw1.shape[1]          # hidden_size

    zero_nh = jnp.zeros((N, H), jnp.float32)
    w1_u1 = jnp.concatenate([zw1,     zero_nh, zero_nh, zero_nh,    zero_nh], axis=1)
    w1_u2 = jnp.concatenate([zero_nh, xw1,     zero_nh, vw1[:N, :], zero_nh], axis=1)
    w1_u3 = jnp.concatenate([zero_nh, zero_nh, ww1,     vw1[N:, :], zero_nh], axis=1)
    w1_u4 = jnp.concatenate([zero_nh, zero_nh, zero_nh, zero_nh,    yw1],     axis=1)
    w1s = jnp.stack([w1_u1, w1_u2, w1_u3, w1_u4], axis=0).astype(compute_dtype)  # (4,N,5H)

    b1p = jnp.concatenate([zb1, xb1, wb1, vb1, yb1], axis=1)   # (1, 5H)

    zero_h1 = jnp.zeros((H, 1), jnp.float32)
    # Block-diagonal second layer: columns produce [Z, Rx, Rw, V, Ry].
    w2p = jnp.concatenate(
        [
            jnp.concatenate([zw2,     zero_h1, zero_h1, zero_h1, zero_h1], axis=1),
            jnp.concatenate([zero_h1, xw2,     zero_h1, zero_h1, zero_h1], axis=1),
            jnp.concatenate([zero_h1, zero_h1, ww2,     zero_h1, zero_h1], axis=1),
            jnp.concatenate([zero_h1, zero_h1, zero_h1, vw2,     zero_h1], axis=1),
            jnp.concatenate([zero_h1, zero_h1, zero_h1, zero_h1, yw2],     axis=1),
        ],
        axis=0,
    )  # (5H, 5)
    b2p = jnp.concatenate([zb2, xb2, wb2, vb2, yb2], axis=1)   # (1, 5)

    tx = params["theta_x"][0, 0]
    tw = params["theta_w"][0, 0]
    ty0 = params["theta_y"][0, 0]
    ty1 = params["theta_y"][0, 1]
    one = jnp.float32(1.0)
    zero = jnp.float32(0.0)

    # Mixing matrix M: rows index [Z, Rx, Rw, V, Ry], cols index [X, Y, Z, W, V]
    #   X = tx*Z + Rx ; W = tw*X + Rw ; Y = ty0*W + ty1*V + Ry
    # TODO(synk): optional `is_x` override of X is not implemented (is_x=None path only).
    M = jnp.stack(
        [
            jnp.stack([tx,   ty0 * tw * tx, one,  tw * tx, zero]),
            jnp.stack([one,  ty0 * tw,      zero, tw,      zero]),
            jnp.stack([zero, ty0,           zero, one,     zero]),
            jnp.stack([zero, ty1,           zero, zero,    one]),
            jnp.stack([zero, one,           zero, zero,    zero]),
        ]
    )  # (5, 5)

    w2f = w2p @ M   # (5H, 5)
    b2f = b2p @ M   # (1, 5)
    return w1s, b1p, w2f, b2f


def _pick_block_b(B, target=4096):
    """Largest multiple-of-8 divisor of B that is <= target and gives >= 2 grid
    steps (so v7x's two TensorCores both get work).  Target 4096 keeps the
    worst-case double-buffered VMEM footprint (~28 MiB, since 8-wide u tiles pad
    to 128 lanes) inside the raised 48 MiB scoped limit on every generation.
    Tiny or non-8-divisible batches fall back to a single whole-batch block."""
    if B < 16 or B % 8 != 0:
        return B
    hi = min(target, B // 2)
    best = None
    for cand in range(8, hi + 1, 8):
        if B % cand == 0:
            best = cand
    return best if best is not None else B


# --------------------------------------------------------------------------- #
# Wrapper
# --------------------------------------------------------------------------- #
def generator_forward(u1, u2, u3, u4, params, block_b=None,
                      compute_dtype=jnp.float32):
    """Generator forward pass (is_x=None path) as a single fused Pallas kernel.

    Returns (B, 5) = cat([X, Y, Z, W, V], axis=1), matching the PyTorch module.
    """
    B, N = u1.shape
    w1s, b1p, w2f, b2f = pack_generator_params(params, compute_dtype)
    H5 = b1p.shape[1]   # 5 * hidden_size

    if block_b is None:
        block_b = _pick_block_b(B)
    grid = (B // block_b,)

    flops = 2 * B * (4 * N * H5 + H5 * 5)
    bytes_accessed = int(
        (4 * B * N + B * 5) * 4                      # u inputs + output (f32)
        + w1s.size * jnp.dtype(w1s.dtype).itemsize   # resident weights
        + (b1p.size + w2f.size + b2f.size) * 4
    )

    u_spec = pl.BlockSpec((block_b, N), lambda i: (i, 0))

    return pl.pallas_call(
        _make_generator_kernel(compute_dtype),
        out_shape=jax.ShapeDtypeStruct((B, 5), jnp.float32),
        grid_spec=pltpu.PrefetchScalarGridSpec(
            num_scalar_prefetch=0,
            grid=grid,
            in_specs=[
                u_spec, u_spec, u_spec, u_spec,                  # u1..u4 (tiled)
                pl.BlockSpec(w1s.shape, lambda i: (0, 0, 0)),    # weights resident
                pl.BlockSpec(b1p.shape, lambda i: (0, 0)),
                pl.BlockSpec(w2f.shape, lambda i: (0, 0)),
                pl.BlockSpec(b2f.shape, lambda i: (0, 0)),
            ],
            out_specs=pl.BlockSpec((block_b, 5), lambda i: (i, 0)),
        ),
        compiler_params=pltpu.CompilerParams(
            dimension_semantics=("parallel",),
            vmem_limit_bytes=48 * 1024 * 1024,
        ),
        cost_estimate=pl.CostEstimate(
            flops=flops, transcendentals=0, bytes_accessed=bytes_accessed),
    )(u1, u2, u3, u4, w1s, b1p, w2f, b2f)


# --------------------------------------------------------------------------- #
# Parameter init + pure-JAX reference (matches the PyTorch forward, is_x=None)
# --------------------------------------------------------------------------- #
def _init_linear(key, in_dim, out_dim):
    k_w, k_b = jax.random.split(key)
    bound = 1.0 / jnp.sqrt(in_dim)
    w = jax.random.uniform(k_w, (in_dim, out_dim), jnp.float32, -bound, bound)
    b = jax.random.uniform(k_b, (1, out_dim), jnp.float32, -bound, bound)
    return w, b


def init_generator_params(key, noise_size, hidden_size):
    keys = jax.random.split(key, 13)
    params = {}
    names_in = [("Gz", noise_size), ("Gx", noise_size), ("Gw", noise_size),
                ("Gv", 2 * noise_size), ("Gy", noise_size)]
    for i, (name, in_dim) in enumerate(names_in):
        w1, b1 = _init_linear(keys[2 * i], in_dim, hidden_size)
        w2, b2 = _init_linear(keys[2 * i + 1], hidden_size, 1)
        params[name] = (w1, b1, w2, b2)
    params["theta_x"] = 0.02 * jax.random.normal(keys[10], (1, 1), jnp.float32)
    params["theta_w"] = 0.02 * jax.random.normal(keys[11], (1, 1), jnp.float32)
    params["theta_y"] = 0.02 * jax.random.normal(keys[12], (1, 2), jnp.float32)
    return params


def generator_reference(u1, u2, u3, u4, params):
    def mlp(x, p):
        w1, b1, w2, b2 = p
        return jnp.maximum(x @ w1 + b1, 0.0) @ w2 + b2

    Z = mlp(u1, params["Gz"])
    Rx = mlp(u2, params["Gx"])
    Rw = mlp(u3, params["Gw"])
    V = mlp(jnp.concatenate([u2, u3], axis=1), params["Gv"])
    Ry = mlp(u4, params["Gy"])
    X = params["theta_x"][0, 0] * Z + Rx
    W = params["theta_w"][0, 0] * X + Rw
    Y = params["theta_y"][0, 0] * W + params["theta_y"][0, 1] * V + Ry
    return jnp.concatenate([X, Y, Z, W, V], axis=1)


if __name__ == "__main__":
    noise_size = 8
    hidden_size = 32
    batch = 128   # small, but yields a 2-step grid so the parallel batch axis is exercised

    key = jax.random.PRNGKey(0)
    k_p, k1, k2, k3, k4 = jax.random.split(key, 5)

    params = init_generator_params(k_p, noise_size, hidden_size)
    u1 = jax.random.normal(k1, (batch, noise_size), jnp.float32)
    u2 = jax.random.normal(k2, (batch, noise_size), jnp.float32)
    u3 = jax.random.normal(k3, (batch, noise_size), jnp.float32)
    u4 = jax.random.normal(k4, (batch, noise_size), jnp.float32)

    out = generator_forward(u1, u2, u3, u4, params)
    out = jax.block_until_ready(out)

    ref = generator_reference(u1, u2, u3, u4, params)
    assert out.shape == (batch, 5), out.shape
    assert jnp.allclose(out, ref, atol=2e-5, rtol=2e-5), (
        f"max abs diff {jnp.max(jnp.abs(out - ref))}"
    )
    print("KERNEL_OK")
</pallas_src>

<mosaic_0001>
module attributes {stable_mosaic.version = 11 : i64} {
  func.func @kernel(%arg0: i32, %arg1: memref<64x8xf32, #tpu.memory_space<vmem>>, %arg2: memref<64x8xf32, #tpu.memory_space<vmem>>, %arg3: memref<64x8xf32, #tpu.memory_space<vmem>>, %arg4: memref<64x8xf32, #tpu.memory_space<vmem>>, %arg5: memref<4x8x160xf32, #tpu.memory_space<vmem>>, %arg6: memref<1x160xf32, #tpu.memory_space<vmem>>, %arg7: memref<160x5xf32, #tpu.memory_space<vmem>>, %arg8: memref<1x5xf32, #tpu.memory_space<vmem>>, %arg9: memref<64x5xf32, #tpu.memory_space<vmem>>) attributes {dimension_semantics = [#tpu.dimension_semantics<parallel>], iteration_bounds = array<i64: 2>, scalar_prefetch = 0 : i64, scratch_operands = 0 : i64, tpu.core_type = #tpu.core_type<tc>, window_params = [{transform_indices = @transform_0, window_bounds = array<i64: 64, 8>}, {transform_indices = @transform_1, window_bounds = array<i64: 64, 8>}, {transform_indices = @transform_2, window_bounds = array<i64: 64, 8>}, {transform_indices = @transform_3, window_bounds = array<i64: 64, 8>}, {pipeline_mode = #tpu.pipeline_mode<synchronous>, transform_indices = @transform_4, window_bounds = array<i64: 4, 8, 160>}, {pipeline_mode = #tpu.pipeline_mode<synchronous>, transform_indices = @transform_5, window_bounds = array<i64: 1, 160>}, {pipeline_mode = #tpu.pipeline_mode<synchronous>, transform_indices = @transform_6, window_bounds = array<i64: 160, 5>}, {pipeline_mode = #tpu.pipeline_mode<synchronous>, transform_indices = @transform_7, window_bounds = array<i64: 1, 5>}, {transform_indices = @transform_8, window_bounds = array<i64: 64, 5>}]} {
    %c0 = arith.constant 0 : index
    %c0_0 = arith.constant 0 : index
    %0 = vector.load %arg1[%c0, %c0_0] : memref<64x8xf32, #tpu.memory_space<vmem>>, vector<64x8xf32>
    %c0_1 = arith.constant 0 : index
    %c0_2 = arith.constant 0 : index
    %c0_3 = arith.constant 0 : index
    %1 = vector.load %arg5[%c0_1, %c0_2, %c0_3] : memref<4x8x160xf32, #tpu.memory_space<vmem>>, vector<1x8x160xf32>
    %2 = vector.shape_cast %1 : vector<1x8x160xf32> to vector<8x160xf32>
    %cst = arith.constant dense<0.000000e+00> : vector<64x160xf32>
    %3 = tpu.matmul %0, %2, %cst {dimension_numbers = #tpu.dot_dimension_numbers<[1], [0], [0], [1], [0, 0, 1, 1], [], []>} : vector<64x8xf32>, vector<8x160xf32>, vector<64x160xf32> -> vector<64x160xf32>
    %c0_4 = arith.constant 0 : index
    %c0_5 = arith.constant 0 : index
    %4 = vector.load %arg2[%c0_4, %c0_5] : memref<64x8xf32, #tpu.memory_space<vmem>>, vector<64x8xf32>
    %c1 = arith.constant 1 : index
    %c0_6 = arith.constant 0 : index
    %c0_7 = arith.constant 0 : index
    %5 = vector.load %arg5[%c1, %c0_6, %c0_7] : memref<4x8x160xf32, #tpu.memory_space<vmem>>, vector<1x8x160xf32>
    %6 = vector.shape_cast %5 : vector<1x8x160xf32> to vector<8x160xf32>
    %cst_8 = arith.constant dense<0.000000e+00> : vector<64x160xf32>
    %7 = tpu.matmul %4, %6, %cst_8 {dimension_numbers = #tpu.dot_dimension_numbers<[1], [0], [0], [1], [0, 0, 1, 1], [], []>} : vector<64x8xf32>, vector<8x160xf32>, vector<64x160xf32> -> vector<64x160xf32>
    %8 = arith.addf %3, %7 : vector<64x160xf32>
    %c0_9 = arith.constant 0 : index
    %c0_10 = arith.constant 0 : index
    %9 = vector.load %arg3[%c0_9, %c0_10] : memref<64x8xf32, #tpu.memory_space<vmem>>, vector<64x8xf32>
    %c2 = arith.constant 2 : index
    %c0_11 = arith.constant 0 : index
    %c0_12 = arith.constant 0 : index
    %10 = vector.load %arg5[%c2, %c0_11, %c0_12] : memref<4x8x160xf32, #tpu.memory_space<vmem>>, vector<1x8x160xf32>
    %11 = vector.shape_cast %10 : vector<1x8x160xf32> to vector<8x160xf32>
    %cst_13 = arith.constant dense<0.000000e+00> : vector<64x160xf32>
    %12 = tpu.matmul %9, %11, %cst_13 {dimension_numbers = #tpu.dot_dimension_numbers<[1], [0], [0], [1], [0, 0, 1, 1], [], []>} : vector<64x8xf32>, vector<8x160xf32>, vector<64x160xf32> -> vector<64x160xf32>
    %13 = arith.addf %8, %12 : vector<64x160xf32>
    %c0_14 = arith.constant 0 : index
    %c0_15 = arith.constant 0 : index
    %14 = vector.load %arg4[%c0_14, %c0_15] : memref<64x8xf32, #tpu.memory_space<vmem>>, vector<64x8xf32>
    %c3 = arith.constant 3 : index
    %c0_16 = arith.constant 0 : index
    %c0_17 = arith.constant 0 : index
    %15 = vector.load %arg5[%c3, %c0_16, %c0_17] : memref<4x8x160xf32, #tpu.memory_space<vmem>>, vector<1x8x160xf32>
    %16 = vector.shape_cast %15 : vector<1x8x160xf32> to vector<8x160xf32>
    %cst_18 = arith.constant dense<0.000000e+00> : vector<64x160xf32>
    %17 = tpu.matmul %14, %16, %cst_18 {dimension_numbers = #tpu.dot_dimension_numbers<[1], [0], [0], [1], [0, 0, 1, 1], [], []>} : vector<64x8xf32>, vector<8x160xf32>, vector<64x160xf32> -> vector<64x160xf32>
    %18 = arith.addf %13, %17 : vector<64x160xf32>
    %c0_19 = arith.constant 0 : index
    %c0_20 = arith.constant 0 : index
    %19 = vector.load %arg6[%c0_19, %c0_20] : memref<1x160xf32, #tpu.memory_space<vmem>>, vector<1x160xf32>
    %20 = vector.broadcast %19 : vector<1x160xf32> to vector<64x160xf32>
    %21 = arith.addf %18, %20 : vector<64x160xf32>
    %cst_21 = arith.constant 0.000000e+00 : f32
    %22 = vector.broadcast %cst_21 : f32 to vector<64x160xf32>
    %23 = arith.maximumf %21, %22 : vector<64x160xf32>
    %c0_22 = arith.constant 0 : index
    %c0_23 = arith.constant 0 : index
    %24 = vector.load %arg7[%c0_22, %c0_23] : memref<160x5xf32, #tpu.memory_space<vmem>>, vector<160x5xf32>
    %cst_24 = arith.constant dense<0.000000e+00> : vector<64x5xf32>
    %25 = tpu.matmul %23, %24, %cst_24 {dimension_numbers = #tpu.dot_dimension_numbers<[1], [0], [0], [1], [0, 0, 1, 1], [], []>} : vector<64x160xf32>, vector<160x5xf32>, vector<64x5xf32> -> vector<64x5xf32>
    %c0_25 = arith.constant 0 : index
    %c0_26 = arith.constant 0 : index
    %26 = vector.load %arg8[%c0_25, %c0_26] : memref<1x5xf32, #tpu.memory_space<vmem>>, vector<1x5xf32>
    %27 = vector.broadcast %26 : vector<1x5xf32> to vector<64x5xf32>
    %28 = arith.addf %25, %27 : vector<64x5xf32>
    %c0_27 = arith.constant 0 : index
    %c0_28 = arith.constant 0 : index
    %29 = vector.load %arg9[%c0_27, %c0_28] : memref<64x5xf32, #tpu.memory_space<vmem>>, vector<64x5xf32>
    tpu.vector_store %arg9[%c0_27, %c0_28], %28 {strides = array<i32>} : memref<64x5xf32, #tpu.memory_space<vmem>>, vector<64x5xf32>,
    return
  }
  func.func @transform_0(%arg0: i32) -> (i32, i32) {
    %c0_i32 = arith.constant 0 : i32
    %c0_i32_0 = arith.constant 0 : i32
    return %arg0, %c0_i32 : i32, i32
  }
  func.func @transform_1(%arg0: i32) -> (i32, i32) {
    %c0_i32 = arith.constant 0 : i32
    %c0_i32_0 = arith.constant 0 : i32
    return %arg0, %c0_i32 : i32, i32
  }
  func.func @transform_2(%arg0: i32) -> (i32, i32) {
    %c0_i32 = arith.constant 0 : i32
    %c0_i32_0 = arith.constant 0 : i32
    return %arg0, %c0_i32 : i32, i32
  }
  func.func @transform_3(%arg0: i32) -> (i32, i32) {
    %c0_i32 = arith.constant 0 : i32
    %c0_i32_0 = arith.constant 0 : i32
    return %arg0, %c0_i32 : i32, i32
  }
  func.func @transform_4(%arg0: i32) -> (i32, i32, i32) {
    %c0_i32 = arith.constant 0 : i32
    %c0_i32_0 = arith.constant 0 : i32
    %c0_i32_1 = arith.constant 0 : i32
    %c0_i32_2 = arith.constant 0 : i32
    return %c0_i32, %c0_i32_0, %c0_i32_1 : i32, i32, i32
  }
  func.func @transform_5(%arg0: i32) -> (i32, i32) {
    %c0_i32 = arith.constant 0 : i32
    %c0_i32_0 = arith.constant 0 : i32
    %c0_i32_1 = arith.constant 0 : i32
    return %c0_i32, %c0_i32_0 : i32, i32
  }
  func.func @transform_6(%arg0: i32) -> (i32, i32) {
    %c0_i32 = arith.constant 0 : i32
    %c0_i32_0 = arith.constant 0 : i32
    %c0_i32_1 = arith.constant 0 : i32
    return %c0_i32, %c0_i32_0 : i32, i32
  }
  func.func @transform_7(%arg0: i32) -> (i32, i32) {
    %c0_i32 = arith.constant 0 : i32
    %c0_i32_0 = arith.constant 0 : i32
    %c0_i32_1 = arith.constant 0 : i32
    return %c0_i32, %c0_i32_0 : i32, i32
  }
  func.func @transform_8(%arg0: i32) -> (i32, i32) {
    %c0_i32 = arith.constant 0 : i32
    %c0_i32_0 = arith.constant 0 : i32
    return %arg0, %c0_i32 : i32, i32
  }
}

</mosaic_0001>

<llo_original>
// kernel: tpu_custom_call.1
$region0: #{tpu_custom_call.1}
  #allocation0 [shape = 'u32[]', space=smem, size = 0x4, offset = 0x4, fixed_abs, tag = 'smem constant byte address 0x4 - core index']
  #allocation1 [shape = 'u32[144,128]{1,0:T(1,128)}', space=vmem, size = 0x12000, scoped, tag = 'internal scratch']
  %s0 = inlined_call_operand.vmem [shape: f32[128,8], index: 0, kind: input, shape index: {}]
  %s1 = inlined_call_operand.vmem [shape: f32[128,8], index: 1, kind: input, shape index: {}]
  %s2 = inlined_call_operand.vmem [shape: f32[128,8], index: 2, kind: input, shape index: {}]
  %s3 = inlined_call_operand.vmem [shape: f32[128,8], index: 3, kind: input, shape index: {}]
  %s4 = inlined_call_operand.vmem [shape: f32[4,8,160], index: 4, kind: input, shape index: {}]
  %s5 = inlined_call_operand.vmem [shape: f32[1,160], index: 5, kind: input, shape index: {}]
  %s6 = inlined_call_operand.vmem [shape: f32[160,5], index: 6, kind: input, shape index: {}]
  %s7 = inlined_call_operand.vmem [shape: f32[1,5], index: 7, kind: input, shape index: {}]
  %s8 = inlined_call_operand.vmem [shape: f32[128,5], index: 8, kind: output, shape index: {}]
  %s9 = sld [smem:[#allocation0]]
  $region65: #{tpu_custom_call.1} parent=0
    _
  %s11 = ssub.s32 1, %s9
  %s12 = scalar_select 0, %s11, %s9
  loop: start=0, step=1, limit=4
  $region2: #{tpu_custom_call.1} parent=0 // loop_pre_header
    _
  $region3: #{tpu_custom_call.1} parent=0 // loop_header
    %s14 = sphi 0, %s18
    %p15 = scmp.ge.s32.totalorder %s14, 4
    %s24 = sphi 0, %s26
    %s27 = sphi 0, %s24
    %s28 = sphi 0, %s27
    %s44 = sphi 0, %s28
    %s50 = sphi 0, %s52
    %s53 = sphi 0, %s50
    %s54 = sphi 0, %s53
    %s70 = sphi 0, %s54
    %s76 = sphi 0, %s78
    %s79 = sphi 0, %s76
    %s80 = sphi 0, %s79
    %s96 = sphi 0, %s80
    %s102 = sphi 0, %s104
    %s105 = sphi 0, %s102
    %s106 = sphi 0, %s105
    %s122 = sphi 0, %s106
    %s126 = sphi 0, %s126
    %s128 = sphi 0, %s126
    %s129 = sphi 0, %s128
    %s143 = sphi 0, %s129
    %s147 = sphi 0, %s147
    %s149 = sphi 0, %s147
    %s150 = sphi 0, %s149
    %s164 = sphi 0, %s150
    %s168 = sphi 0, %s168
    %s170 = sphi 0, %s168
    %s171 = sphi 0, %s170
    %s185 = sphi 0, %s171
    %s189 = sphi 0, %s189
    %s191 = sphi 0, %s189
    %s192 = sphi 0, %s191
    %s206 = sphi 0, %s192
    %s212 = sphi 0, %s214
    %s215 = sphi 0, %s212
    %s216 = sphi 0, %s215
    %s232 = sphi 0, %s216
  $region4: #{tpu_custom_call.1} parent=0 // loop_header_branch
    %17 = sbr.rel (%p15) target = $region8
  $region5: #{tpu_custom_call.1} parent=0 // loop_body
    %s19 = ssub.s32 %s14, 1
    %s20 = ssub.s32 %s14, 2
    %s21 = sadd.s32 %s14, 1
    %s22 = ssub.s32 %s14, %s21
    %p23 = scmp.eq.s32.totalorder %s22, 0
    %s25 = sadd.s32 %s24, 1
    %s26 = scalar_select %p23, %s24, %s25
    %p29 = pneg %p23
    %p30 = scmp.eq.s32.totalorder %s14, 1
    %p31 = por %p29, %p30
    %p32 = scmp.ne.s32.totalorder %s24, %s27
    %p33 = scmp.eq.s32.totalorder %s14, 0
    %p34 = por %p32, %p33
    %p35 = scmp.ne.s32.totalorder %s24, %s27
    %p36 = scmp.eq.s32.totalorder %s19, 1
    %p37 = por %p35, %p36
    %p38 = scmp.ne.s32.totalorder %s27, %s28
    %p39 = scmp.eq.s32.totalorder %s19, 0
    %p40 = por %p38, %p39
    %p41 = scmp.ne.s32.totalorder %s27, %s28
    %p42 = scmp.eq.s32.totalorder %s20, 1
    %p43 = por %p41, %p42
    %p45 = scmp.ne.s32.totalorder %s28, %s44
    %p46 = scmp.eq.s32.totalorder %s20, 0
    %p47 = por %p45, %p46
    %s48 = ssub.s32 %s14, %s21
    %p49 = scmp.eq.s32.totalorder %s48, 0
    %s51 = sadd.s32 %s50, 1
    %s52 = scalar_select %p49, %s50, %s51
    %p55 = pneg %p49
    %p56 = scmp.eq.s32.totalorder %s14, 1
    %p57 = por %p55, %p56
    %p58 = scmp.ne.s32.totalorder %s50, %s53
    %p59 = scmp.eq.s32.totalorder %s14, 0
    %p60 = por %p58, %p59
    %p61 = scmp.ne.s32.totalorder %s50, %s53
    %p62 = scmp.eq.s32.totalorder %s19, 1
    %p63 = por %p61, %p62
    %p64 = scmp.ne.s32.totalorder %s53, %s54
    %p65 = scmp.eq.s32.totalorder %s19, 0
    %p66 = por %p64, %p65
    %p67 = scmp.ne.s32.totalorder %s53, %s54
    %p68 = scmp.eq.s32.totalorder %s20, 1
    %p69 = por %p67, %p68
    %p71 = scmp.ne.s32.totalorder %s54, %s70
    %p72 = scmp.eq.s32.totalorder %s20, 0
    %p73 = por %p71, %p72
    %s74 = ssub.s32 %s14, %s21
    %p75 = scmp.eq.s32.totalorder %s74, 0
    %s77 = sadd.s32 %s76, 1
    %s78 = scalar_select %p75, %s76, %s77
    %p81 = pneg %p75
    %p82 = scmp.eq.s32.totalorder %s14, 1
    %p83 = por %p81, %p82
    %p84 = scmp.ne.s32.totalorder %s76, %s79
    %p85 = scmp.eq.s32.totalorder %s14, 0
    %p86 = por %p84, %p85
    %p87 = scmp.ne.s32.totalorder %s76, %s79
    %p88 = scmp.eq.s32.totalorder %s19, 1
    %p89 = por %p87, %p88
    %p90 = scmp.ne.s32.totalorder %s79, %s80
    %p91 = scmp.eq.s32.totalorder %s19, 0
    %p92 = por %p90, %p91
    %p93 = scmp.ne.s32.totalorder %s79, %s80
    %p94 = scmp.eq.s32.totalorder %s20, 1
    %p95 = por %p93, %p94
    %p97 = scmp.ne.s32.totalorder %s80, %s96
    %p98 = scmp.eq.s32.totalorder %s20, 0
    %p99 = por %p97, %p98
    %s100 = ssub.s32 %s14, %s21
    %p101 = scmp.eq.s32.totalorder %s100, 0
    %s103 = sadd.s32 %s102, 1
    %s104 = scalar_select %p101, %s102, %s103
    %p107 = pneg %p101
    %p108 = scmp.eq.s32.totalorder %s14, 1
    %p109 = por %p107, %p108
    %p110 = scmp.ne.s32.totalorder %s102, %s105
    %p111 = scmp.eq.s32.totalorder %s14, 0
    %p112 = por %p110, %p111
    %p113 = scmp.ne.s32.totalorder %s102, %s105
    %p114 = scmp.eq.s32.totalorder %s19, 1
    %p115 = por %p113, %p114
    %p116 = scmp.ne.s32.totalorder %s105, %s106
    %p117 = scmp.eq.s32.totalorder %s19, 0
    %p118 = por %p116, %p117
    %p119 = scmp.ne.s32.totalorder %s105, %s106
    %p120 = scmp.eq.s32.totalorder %s20, 1
    %p121 = por %p119, %p120
    %p123 = scmp.ne.s32.totalorder %s106, %s122
    %p124 = scmp.eq.s32.totalorder %s20, 0
    %p125 = por %p123, %p124
    %s127 = sadd.s32 %s126, 1
    %p130 = scmp.eq.s32.totalorder %s14, 1
    %p131 = scmp.ne.s32.totalorder %s126, %s128
    %p132 = scmp.eq.s32.totalorder %s14, 0
    %p133 = por %p131, %p132
    %p134 = scmp.ne.s32.totalorder %s126, %s128
    %p135 = scmp.eq.s32.totalorder %s19, 1
    %p136 = por %p134, %p135
    %p137 = scmp.ne.s32.totalorder %s128, %s129
    %p138 = scmp.eq.s32.totalorder %s19, 0
    %p139 = por %p137, %p138
    %p140 = scmp.ne.s32.totalorder %s128, %s129
    %p141 = scmp.eq.s32.totalorder %s20, 1
    %p142 = por %p140, %p141
    %p144 = scmp.ne.s32.totalorder %s129, %s143
    %p145 = scmp.eq.s32.totalorder %s20, 0
    %p146 = por %p144, %p145
    %s148 = sadd.s32 %s147, 1
    %p151 = scmp.eq.s32.totalorder %s14, 1
    %p152 = scmp.ne.s32.totalorder %s147, %s149
    %p153 = scmp.eq.s32.totalorder %s14, 0
    %p154 = por %p152, %p153
    %p155 = scmp.ne.s32.totalorder %s147, %s149
    %p156 = scmp.eq.s32.totalorder %s19, 1
    %p157 = por %p155, %p156
    %p158 = scmp.ne.s32.totalorder %s149, %s150
    %p159 = scmp.eq.s32.totalorder %s19, 0
    %p160 = por %p158, %p159
    %p161 = scmp.ne.s32.totalorder %s149, %s150
    %p162 = scmp.eq.s32.totalorder %s20, 1
    %p163 = por %p161, %p162
    %p165 = scmp.ne.s32.totalorder %s150, %s164
    %p166 = scmp.eq.s32.totalorder %s20, 0
    %p167 = por %p165, %p166
    %s169 = sadd.s32 %s168, 1
    %p172 = scmp.eq.s32.totalorder %s14, 1
    %p173 = scmp.ne.s32.totalorder %s168, %s170
    %p174 = scmp.eq.s32.totalorder %s14, 0
    %p175 = por %p173, %p174
    %p176 = scmp.ne.s32.totalorder %s168, %s170
    %p177 = scmp.eq.s32.totalorder %s19, 1
    %p178 = por %p176, %p177
    %p179 = scmp.ne.s32.totalorder %s170, %s171
    %p180 = scmp.eq.s32.totalorder %s19, 0
    %p181 = por %p179, %p180
    %p182 = scmp.ne.s32.totalorder %s170, %s171
    %p183 = scmp.eq.s32.totalorder %s20, 1
    %p184 = por %p182, %p183
    %p186 = scmp.ne.s32.totalorder %s171, %s185
    %p187 = scmp.eq.s32.totalorder %s20, 0
    %p188 = por %p186, %p187
    %s190 = sadd.s32 %s189, 1
    %p193 = scmp.eq.s32.totalorder %s14, 1
    %p194 = scmp.ne.s32.totalorder %s189, %s191
    %p195 = scmp.eq.s32.totalorder %s14, 0
    %p196 = por %p194, %p195
    %p197 = scmp.ne.s32.totalorder %s189, %s191
    %p198 = scmp.eq.s32.totalorder %s19, 1
    %p199 = por %p197, %p198
    %p200 = scmp.ne.s32.totalorder %s191, %s192
    %p201 = scmp.eq.s32.totalorder %s19, 0
    %p202 = por %p200, %p201
    %p203 = scmp.ne.s32.totalorder %s191, %s192
    %p204 = scmp.eq.s32.totalorder %s20, 1
    %p205 = por %p203, %p204
    %p207 = scmp.ne.s32.totalorder %s192, %s206
    %p208 = scmp.eq.s32.totalorder %s20, 0
    %p209 = por %p207, %p208
    %s210 = ssub.s32 %s14, %s21
    %p211 = scmp.eq.s32.totalorder %s210, 0
    %s213 = sadd.s32 %s212, 1
    %s214 = scalar_select %p211, %s212, %s213
    %p217 = pneg %p211
    %p218 = scmp.eq.s32.totalorder %s14, 1
    %p219 = por %p217, %p218
    %p220 = scmp.ne.s32.totalorder %s212, %s215
    %p221 = scmp.eq.s32.totalorder %s14, 0
    %p222 = por %p220, %p221
    %p223 = scmp.ne.s32.totalorder %s212, %s215
    %p224 = scmp.eq.s32.totalorder %s19, 1
    %p225 = por %p223, %p224
    %p226 = scmp.ne.s32.totalorder %s215, %s216
    %p227 = scmp.eq.s32.totalorder %s19, 0
    %p228 = por %p226, %p227
    %p229 = scmp.ne.s32.totalorder %s215, %s216
    %p230 = scmp.eq.s32.totalorder %s20, 1
    %p231 = por %p229, %p230
    %p233 = scmp.ne.s32.totalorder %s216, %s232
    %p234 = scmp.eq.s32.totalorder %s20, 0
    %p235 = por %p233, %p234
    %p236 = scmp.le.s32.totalorder 1, %s14
    %p237 = scmp.lt.s32.totalorder %s14, 3
    %p238 = pnand %p236, %p237
    %p239 = pneg %p238
    // Predicated region
    $region9: #{tpu_custom_call.1} parent=5 // pred_check
      _
    $region10: #{tpu_custom_call.1} parent=5 // pred_check_branch
      %241 = sbr.rel (%p238) target = $region12
    $region11: #{tpu_custom_call.1} parent=5 // pred_region
      %s242 = ssub.s32 %s14, 1
      // Predicated region
      $region13: #{tpu_custom_call.1} parent=11 // pred_check
        %p243 = pneg %p139
      $region14: #{tpu_custom_call.1} parent=11 // pred_check_branch
        %245 = sbr.rel (%p243) target = $region16
      $region15: #{tpu_custom_call.1} parent=11 // pred_region
        _
      $region16: #{tpu_custom_call.1} parent=11 // pred_fallthru
        _
      // Predicated region
      $region17: #{tpu_custom_call.1} parent=11 // pred_check
        %p246 = pneg %p160
      $region18: #{tpu_custom_call.1} parent=11 // pred_check_branch
        %248 = sbr.rel (%p246) target = $region20
      $region19: #{tpu_custom_call.1} parent=11 // pred_region
        _
      $region20: #{tpu_custom_call.1} parent=11 // pred_fallthru
        _
      // Predicated region
      $region21: #{tpu_custom_call.1} parent=11 // pred_check
        %p249 = pneg %p181
      $region22: #{tpu_custom_call.1} parent=11 // pred_check_branch
        %251 = sbr.rel (%p249) target = $region24
      $region23: #{tpu_custom_call.1} parent=11 // pred_region
        _
      $region24: #{tpu_custom_call.1} parent=11 // pred_fallthru
        _
      // Predicated region
      $region25: #{tpu_custom_call.1} parent=11 // pred_check
        %p252 = pneg %p202
      $region26: #{tpu_custom_call.1} parent=11 // pred_check_branch
        %254 = sbr.rel (%p252) target = $region28
      $region27: #{tpu_custom_call.1} parent=11 // pred_region
        _
      $region28: #{tpu_custom_call.1} parent=11 // pred_fallthru
        _
    $region12: #{tpu_custom_call.1} parent=5 // pred_fallthru
      _
    %p255 = scmp.lt.s32.totalorder %s14, 2
    // Predicated region
    $region29: #{tpu_custom_call.1} parent=5 // pred_check
      %p256 = pneg %p255
    $region30: #{tpu_custom_call.1} parent=5 // pred_check_branch
      %258 = sbr.rel (%p256) target = $region32
    $region31: #{tpu_custom_call.1} parent=5 // pred_region
      // Predicated region
      $region33: #{tpu_custom_call.1} parent=31 // pred_check
        %p259 = pneg %p34
      $region34: #{tpu_custom_call.1} parent=31 // pred_check_branch
        %261 = sbr.rel (%p259) target = $region36
      $region35: #{tpu_custom_call.1} parent=31 // pred_region
        %s262 = smul.u32 8, %s14
        %p263 = scmp.lt.s32.totalorder %s262, 15
        %s264 = scalar_select %p263, %s262, 15
        %s265 = smul.addr %s264, 8
        %s266 = scalar_lea.vmem %s0, %s265
        %s267 = smul.u32 8, %s14
      $region36: #{tpu_custom_call.1} parent=31 // pred_fallthru
        _
      // Predicated region
      $region37: #{tpu_custom_call.1} parent=31 // pred_check
        %p268 = pneg %p60
      $region38: #{tpu_custom_call.1} parent=31 // pred_check_branch
        %270 = sbr.rel (%p268) target = $region40
      $region39: #{tpu_custom_call.1} parent=31 // pred_region
        %s271 = smul.u32 8, %s14
        %p272 = scmp.lt.s32.totalorder %s271, 15
        %s273 = scalar_select %p272, %s271, 15
        %s274 = smul.addr %s273, 8
        %s275 = scalar_lea.vmem %s1, %s274
        %s276 = smul.u32 8, %s14
      $region40: #{tpu_custom_call.1} parent=31 // pred_fallthru
        _
      // Predicated region
      $region41: #{tpu_custom_call.1} parent=31 // pred_check
        %p277 = pneg %p86
      $region42: #{tpu_custom_call.1} parent=31 // pred_check_branch
        %279 = sbr.rel (%p277) target = $region44
      $region43: #{tpu_custom_call.1} parent=31 // pred_region
        %s280 = smul.u32 8, %s14
        %p281 = scmp.lt.s32.totalorder %s280, 15
        %s282 = scalar_select %p281, %s280, 15
        %s283 = smul.addr %s282, 8
        %s284 = scalar_lea.vmem %s2, %s283
        %s285 = smul.u32 8, %s14
      $region44: #{tpu_custom_call.1} parent=31 // pred_fallthru
        _
      // Predicated region
      $region45: #{tpu_custom_call.1} parent=31 // pred_check
        %p286 = pneg %p112
      $region46: #{tpu_custom_call.1} parent=31 // pred_check_branch
        %288 = sbr.rel (%p286) target = $region48
      $region47: #{tpu_custom_call.1} parent=31 // pred_region
        %s289 = smul.u32 8, %s14
        %p290 = scmp.lt.s32.totalorder %s289, 15
        %s291 = scalar_select %p290, %s289, 15
        %s292 = smul.addr %s291, 8
        %s293 = scalar_lea.vmem %s3, %s292
        %s294 = smul.u32 8, %s14
      $region48: #{tpu_custom_call.1} parent=31 // pred_fallthru
        _
    $region32: #{tpu_custom_call.1} parent=5 // pred_fallthru
      _
    %p295 = scmp.le.s32.totalorder 1, %s14
    %p296 = scmp.lt.s32.totalorder %s14, 3
    %p297 = pnand %p295, %p296
    %p298 = pneg %p297
    // Predicated region
    $region49: #{tpu_custom_call.1} parent=5 // pred_check
      _
    $region50: #{tpu_custom_call.1} parent=5 // pred_check_branch
      %300 = sbr.rel (%p297) target = $region52
    $region51: #{tpu_custom_call.1} parent=5 // pred_region
      %s301 = ssub.s32 %s14, 1
      %s302 = smul.u32 8, %s19
      %p303 = scmp.lt.s32.totalorder %s302, 15
      %s304 = scalar_select %p303, %s302, 15
      %s305 = smul.addr %s304, 8
      %s306 = scalar_lea.vmem %s0, %s305
      %p307 = pneg %p40
      %p308 = pneg %p37
      %s309 = smul.u32 8, %s19
      %p310 = scmp.lt.s32.totalorder %s309, 15
      %s311 = scalar_select %p310, %s309, 15
      %s312 = smul.addr %s311, 8
      %s313 = scalar_lea.vmem %s1, %s312
      %p314 = pneg %p66
      %p315 = pneg %p63
      %s316 = smul.u32 8, %s19
      %p317 = scmp.lt.s32.totalorder %s316, 15
      %s318 = scalar_select %p317, %s316, 15
      %s319 = smul.addr %s318, 8
      %s320 = scalar_lea.vmem %s2, %s319
      %p321 = pneg %p92
      %p322 = pneg %p89
      %s323 = smul.u32 8, %s19
      %p324 = scmp.lt.s32.totalorder %s323, 15
      %s325 = scalar_select %p324, %s323, 15
      %s326 = smul.addr %s325, 8
      %s327 = scalar_lea.vmem %s3, %s326
      %p328 = pneg %p118
      %p329 = pneg %p115
      %p330 = pneg %p139
      %p331 = pneg %p136
      %p332 = pneg %p160
      %p333 = pneg %p157
      %p334 = pneg %p181
      %p335 = pneg %p178
      %p336 = pneg %p202
      %p337 = pneg %p199
      %p338 = pneg %p228
      %p339 = pneg %p225
      %s340 = smul.u32 8, %s19
      %p341 = scmp.lt.s32.totalorder %s340, 15
      %s342 = scalar_select %p341, %s340, 15
      %s343 = smul.addr %s342, 8
      %s344 = scalar_lea.vmem %s8, %s343
      %s345 = smul.u32 8, %s19
      %p346 = scmp.lt.s32.totalorder %s345, 15
      %s347 = scalar_select %p346, %s345, 15
      %s348 = smul.addr %s347, 8
      %s349 = scalar_lea.vmem %s0, %s348
      %s350 = smul.u32 8, %s19
      %s351 = smul.u32 8, %s19
      %p352 = scmp.lt.s32.totalorder %s351, 15
      %s353 = scalar_select %p352, %s351, 15
      %s354 = smul.addr %s353, 8
      %s355 = scalar_lea.vmem %s1, %s354
      %s356 = smul.u32 8, %s19
      %s357 = smul.u32 8, %s19
      %p358 = scmp.lt.s32.totalorder %s357, 15
      %s359 = scalar_select %p358, %s357, 15
      %s360 = smul.addr %s359, 8
      %s361 = scalar_lea.vmem %s2, %s360
      %s362 = smul.u32 8, %s19
      %s363 = smul.u32 8, %s19
      %p364 = scmp.lt.s32.totalorder %s363, 15
      %s365 = scalar_select %p364, %s363, 15
      %s366 = smul.addr %s365, 8
      %s367 = scalar_lea.vmem %s3, %s366
      %s368 = smul.u32 8, %s19
      %s369 = smul.u32 8, %s19
      %p370 = scmp.lt.s32.totalorder %s369, 15
      %s371 = scalar_select %p370, %s369, 15
      %s372 = smul.addr %s371, 8
      %s373 = scalar_lea.vmem %s8, %s372
      %s374 = smul.u32 8, %s19
      %v375 = vld [vmem:[%s349] sm:$0xff]
      %v376 = vld [vmem:[%s349 + $0x8] sm:$0xff]
      %v377 = vld [vmem:[%s349 + $0x10] sm:$0xff]
      %v378 = vld [vmem:[%s349 + $0x18] sm:$0xff]
      %v379 = vld [vmem:[%s349 + $0x20] sm:$0xff]
      %v380 = vld [vmem:[%s349 + $0x28] sm:$0xff]
      %v381 = vld [vmem:[%s349 + $0x30] sm:$0xff]
      %v382 = vld [vmem:[%s349 + $0x38] sm:$0xff]
      %v383 = vld [vmem:[%s4] sm:$0xff]
      %v384 = vld [vmem:[%s4 + $0x8] sm:$0xff]
      %v385 = vld [vmem:[%s355] sm:$0xff]
      %v386 = vld [vmem:[%s355 + $0x8] sm:$0xff]
      %v387 = vld [vmem:[%s355 + $0x10] sm:$0xff]
      %v388 = vld [vmem:[%s355 + $0x18] sm:$0xff]
      %v389 = vld [vmem:[%s355 + $0x20] sm:$0xff]
      %v390 = vld [vmem:[%s355 + $0x28] sm:$0xff]
      %v391 = vld [vmem:[%s355 + $0x30] sm:$0xff]
      %v392 = vld [vmem:[%s355 + $0x38] sm:$0xff]
      %s393 = scalar_lea.vmem %s4, 16
      %v394 = vld [vmem:[%s393] sm:$0xff]
      %v395 = vld [vmem:[%s393 + $0x8] sm:$0xff]
      %vm396 = vcmask 64512
      %v398 = vsel %vm396, %v385, 0
      %v401 = vsel %vm396, %v386, 0
      %v404 = vsel %vm396, %v387, 0
      %v407 = vsel %vm396, %v388, 0
      %v410 = vsel %vm396, %v389, 0
      %v413 = vsel %vm396, %v390, 0
      %v416 = vsel %vm396, %v391, 0
      %v419 = vsel %vm396, %v392, 0
      %421 = vmatprep.subr.mxu0 %v395
      %422 = vmatpush1.msra.mxu0 %v394
      %423 = vmatprep.subr.mxu0 0.0
      %424 = vmatpush1.msra.mxu0 0.0
      %425 = vmatprep.subr.mxu0 0.0
      %426 = vmatpush1.msra.mxu0 0.0
      %427 = vmatprep.subr.mxu0 0.0
      %428 = vmatpush1.msra.mxu0 0.0
      %429 = vmatprep.subr.mxu0 0.0
      %430 = vmatpush1.msra.mxu0 0.0
      %431 = vmatprep.subr.mxu0 0.0
      %432 = vmatpush1.msra.mxu0 0.0
      %433 = vmatprep.subr.mxu0 0.0
      %434 = vmatpush1.msra.mxu0 0.0
      %435 = vmatprep.subr.mxu0 0.0
      %436 = vmatpush1.msra.mxu0 0.0
      %437 = vmatprep.subr.mxu0 0.0
      %438 = vmatpush1.msra.mxu0 0.0
      %439 = vmatprep.subr.mxu0 0.0
      %440 = vmatpush1.msra.mxu0 0.0
      %441 = vmatprep.subr.mxu0 0.0
      %442 = vmatpush1.msra.mxu0 0.0
      %443 = vmatprep.subr.mxu0 0.0
      %444 = vmatpush1.msra.mxu0 0.0
      %445 = vmatprep.subr.mxu0 0.0
      %446 = vmatpush1.msra.mxu0 0.0
      %447 = vmatprep.subr.mxu0 0.0
      %448 = vmatpush1.msra.mxu0 0.0
      %449 = vmatprep.subr.mxu0 0.0
      %450 = vmatpush1.msra.mxu0 0.0
      %451 = vmatprep.subr.mxu0 0.0
      %452 = vmatpush1.msra.mxu0 0.0
      %453 = vmatprep.subr.mxu0 0.0
      %454 = vmatpush1.msra.mxu0 0.0
      %455 = vmatprep.subr.mxu0 0.0
      %456 = vmatpush1.msra.mxu0 0.0
      %457 = vmatprep.subr.mxu0 0.0
      %458 = vmatpush1.msra.mxu0 0.0
      %459 = vmatprep.subr.mxu0 0.0
      %460 = vmatpush1.msra.mxu0 0.0
      %461 = vmatprep.subr.mxu0 0.0
      %462 = vmatpush1.msra.mxu0 0.0
      %463 = vmatprep.subr.mxu0 0.0
      %464 = vmatpush1.msra.mxu0 0.0
      %465 = vmatprep.subr.mxu0 0.0
      %466 = vmatpush1.msra.mxu0 0.0
      %467 = vmatprep.subr.mxu0 0.0
      %468 = vmatpush1.msra.mxu0 0.0
      %469 = vmatprep.subr.mxu0 0.0
      %470 = vmatpush1.msra.mxu0 0.0
      %471 = vmatprep.subr.mxu0 0.0
      %472 = vmatpush1.msra.mxu0 0.0
      %473 = vmatprep.subr.mxu0 0.0
      %474 = vmatpush1.msra.mxu0 0.0
      %475 = vmatprep.subr.mxu0 0.0
      %476 = vmatpush1.msra.mxu0 0.0
      %477 = vmatprep.subr.mxu0 0.0
      %478 = vmatpush1.msra.mxu0 0.0
      %479 = vmatprep.subr.mxu0 0.0
      %480 = vmatpush1.msra.mxu0 0.0
      %481 = vmatprep.subr.mxu0 0.0
      %482 = vmatpush1.msra.mxu0 0.0
      %483 = vmatprep.subr.mxu0 0.0
      %484 = vmatpush1.msra.mxu0 0.0
      %485 = vmatprep.mubr.f32.mxu0 0.0
      %486 = vmatmul.mubr.f32.gmra.mrb[0].mxu0 %v398
      %v487 = vpop.f32.mrb[0].mxu0
      %v488 = vadd.f32 0.0, %v487
      %v489 = vpop.f32.mrb[0].mxu0
      %v490 = vadd.f32 0.0, %v489
      %491 = vmatprep.mubr.f32.mxu0 0.0
      %492 = vmatmul.mubr.f32.gmra.mrb[0].mxu0 %v401
      %v493 = vpop.f32.mrb[0].mxu0
      %v494 = vadd.f32 0.0, %v493
      %v495 = vpop.f32.mrb[0].mxu0
      %v496 = vadd.f32 0.0, %v495
      %497 = vmatprep.mubr.f32.mxu0 0.0
      %498 = vmatmul.mubr.f32.gmra.mrb[0].mxu0 %v404
      %v499 = vpop.f32.mrb[0].mxu0
      %v500 = vadd.f32 0.0, %v499
      %v501 = vpop.f32.mrb[0].mxu0
      %v502 = vadd.f32 0.0, %v501
      %503 = vmatprep.mubr.f32.mxu0 0.0
      %504 = vmatmul.mubr.f32.gmra.mrb[0].mxu0 %v407
      %v505 = vpop.f32.mrb[0].mxu0
      %v506 = vadd.f32 0.0, %v505
      %v507 = vpop.f32.mrb[0].mxu0
      %v508 = vadd.f32 0.0, %v507
      %509 = vmatprep.mubr.f32.mxu0 0.0
      %510 = vmatmul.mubr.f32.gmra.mrb[0].mxu0 %v410
      %v511 = vpop.f32.mrb[0].mxu0
      %v512 = vadd.f32 0.0, %v511
      %v513 = vpop.f32.mrb[0].mxu0
      %v514 = vadd.f32 0.0, %v513
      %515 = vmatprep.mubr.f32.mxu0 0.0
      %516 = vmatmul.mubr.f32.gmra.mrb[0].mxu0 %v413
      %v517 = vpop.f32.mrb[0].mxu0
      %v518 = vadd.f32 0.0, %v517
      %v519 = vpop.f32.mrb[0].mxu0
      %v520 = vadd.f32 0.0, %v519
      %521 = vmatprep.mubr.f32.mxu0 0.0
      %522 = vmatmul.mubr.f32.gmra.mrb[0].mxu0 %v416
      %v523 = vpop.f32.mrb[0].mxu0
      %v524 = vadd.f32 0.0, %v523
      %v525 = vpop.f32.mrb[0].mxu0
      %v526 = vadd.f32 0.0, %v525
      %527 = vmatprep.mubr.f32.mxu0 0.0
      %528 = vmatmul.mubr.f32.gmra.mrb[0].mxu0 %v419
      %v529 = vpop.f32.mrb[0].mxu0
      %v530 = vadd.f32 0.0, %v529
      %v531 = vpop.f32.mrb[0].mxu0
      %v532 = vadd.f32 0.0, %v531
      %533 = vdwg.mxu0
      %v535 = vsel %vm396, %v375, 0
      %v538 = vsel %vm396, %v376, 0
      %v541 = vsel %vm396, %v377, 0
      %v544 = vsel %vm396, %v378, 0
      %v547 = vsel %vm396, %v379, 0
      %v550 = vsel %vm396, %v380, 0
      %v553 = vsel %vm396, %v381, 0
      %v556 = vsel %vm396, %v382, 0
      %558 = vmatprep.subr.mxu0 %v384
      %559 = vmatpush1.msra.mxu0 %v383
      %560 = vmatprep.subr.mxu0 0.0
      %561 = vmatpush1.msra.mxu0 0.0
      %562 = vmatprep.subr.mxu0 0.0
      %563 = vmatpush1.msra.mxu0 0.0
      %564 = vmatprep.subr.mxu0 0.0
      %565 = vmatpush1.msra.mxu0 0.0
      %566 = vmatprep.subr.mxu0 0.0
      %567 = vmatpush1.msra.mxu0 0.0
      %568 = vmatprep.subr.mxu0 0.0
      %569 = vmatpush1.msra.mxu0 0.0
      %570 = vmatprep.subr.mxu0 0.0
      %571 = vmatpush1.msra.mxu0 0.0
      %572 = vmatprep.subr.mxu0 0.0
      %573 = vmatpush1.msra.mxu0 0.0
      %574 = vmatprep.subr.mxu0 0.0
      %575 = vmatpush1.msra.mxu0 0.0
      %576 = vmatprep.subr.mxu0 0.0
      %577 = vmatpush1.msra.mxu0 0.0
      %578 = vmatprep.subr.mxu0 0.0
      %579 = vmatpush1.msra.mxu0 0.0
      %580 = vmatprep.subr.mxu0 0.0
      %581 = vmatpush1.msra.mxu0 0.0
      %582 = vmatprep.subr.mxu0 0.0
      %583 = vmatpush1.msra.mxu0 0.0
      %584 = vmatprep.subr.mxu0 0.0
      %585 = vmatpush1.msra.mxu0 0.0
      %586 = vmatprep.subr.mxu0 0.0
      %587 = vmatpush1.msra.mxu0 0.0
      %588 = vmatprep.subr.mxu0 0.0
      %589 = vmatpush1.msra.mxu0 0.0
      %590 = vmatprep.subr.mxu0 0.0
      %591 = vmatpush1.msra.mxu0 0.0
      %592 = vmatprep.subr.mxu0 0.0
      %593 = vmatpush1.msra.mxu0 0.0
      %594 = vmatprep.subr.mxu0 0.0
      %595 = vmatpush1.msra.mxu0 0.0
      %596 = vmatprep.subr.mxu0 0.0
      %597 = vmatpush1.msra.mxu0 0.0
      %598 = vmatprep.subr.mxu0 0.0
      %599 = vmatpush1.msra.mxu0 0.0
      %600 = vmatprep.subr.mxu0 0.0
      %601 = vmatpush1.msra.mxu0 0.0
      %602 = vmatprep.subr.mxu0 0.0
      %603 = vmatpush1.msra.mxu0 0.0
      %604 = vmatprep.subr.mxu0 0.0
      %605 = vmatpush1.msra.mxu0 0.0
      %606 = vmatprep.subr.mxu0 0.0
      %607 = vmatpush1.msra.mxu0 0.0
      %608 = vmatprep.subr.mxu0 0.0
      %609 = vmatpush1.msra.mxu0 0.0
      %610 = vmatprep.subr.mxu0 0.0
      %611 = vmatpush1.msra.mxu0 0.0
      %612 = vmatprep.subr.mxu0 0.0
      %613 = vmatpush1.msra.mxu0 0.0
      %614 = vmatprep.subr.mxu0 0.0
      %615 = vmatpush1.msra.mxu0 0.0
      %616 = vmatprep.subr.mxu0 0.0
      %617 = vmatpush1.msra.mxu0 0.0
      %618 = vmatprep.subr.mxu0 0.0
      %619 = vmatpush1.msra.mxu0 0.0
      %620 = vmatprep.subr.mxu0 0.0
      %621 = vmatpush1.msra.mxu0 0.0
      %622 = vmatprep.mubr.f32.mxu0 0.0
      %623 = vmatmul.mubr.f32.gmra.mrb[0].mxu0 %v535
      %v624 = vpop.f32.mrb[0].mxu0
      %v625 = vadd.f32 %v488, %v624
      %v626 = vpop.f32.mrb[0].mxu0
      %v627 = vadd.f32 %v490, %v626
      %628 = vmatprep.mubr.f32.mxu0 0.0
      %629 = vmatmul.mubr.f32.gmra.mrb[0].mxu0 %v538
      %v630 = vpop.f32.mrb[0].mxu0
      %v631 = vadd.f32 %v494, %v630
      %v632 = vpop.f32.mrb[0].mxu0
      %v633 = vadd.f32 %v496, %v632
      %634 = vmatprep.mubr.f32.mxu0 0.0
      %635 = vmatmul.mubr.f32.gmra.mrb[0].mxu0 %v541
      %v636 = vpop.f32.mrb[0].mxu0
      %v637 = vadd.f32 %v500, %v636
      %v638 = vpop.f32.mrb[0].mxu0
      %v639 = vadd.f32 %v502, %v638
      %640 = vmatprep.mubr.f32.mxu0 0.0
      %641 = vmatmul.mubr.f32.gmra.mrb[0].mxu0 %v544
      %v642 = vpop.f32.mrb[0].mxu0
      %v643 = vadd.f32 %v506, %v642
      %v644 = vpop.f32.mrb[0].mxu0
      %v645 = vadd.f32 %v508, %v644
      %646 = vmatprep.mubr.f32.mxu0 0.0
      %647 = vmatmul.mubr.f32.gmra.mrb[0].mxu0 %v547
      %v648 = vpop.f32.mrb[0].mxu0
      %v649 = vadd.f32 %v512, %v648
      %v650 = vpop.f32.mrb[0].mxu0
      %v651 = vadd.f32 %v514, %v650
      %652 = vmatprep.mubr.f32.mxu0 0.0
      %653 = vmatmul.mubr.f32.gmra.mrb[0].mxu0 %v550
      %v654 = vpop.f32.mrb[0].mxu0
      %v655 = vadd.f32 %v518, %v654
      %v656 = vpop.f32.mrb[0].mxu0
      %v657 = vadd.f32 %v520, %v656
      %658 = vmatprep.mubr.f32.mxu0 0.0
      %659 = vmatmul.mubr.f32.gmra.mrb[0].mxu0 %v553
      %v660 = vpop.f32.mrb[0].mxu0
      %v661 = vadd.f32 %v524, %v660
      %v662 = vpop.f32.mrb[0].mxu0
      %v663 = vadd.f32 %v526, %v662
      %664 = vmatprep.mubr.f32.mxu0 0.0
      %665 = vmatmul.mubr.f32.gmra.mrb[0].mxu0 %v556
      %v666 = vpop.f32.mrb[0].mxu0
      %v667 = vadd.f32 %v530, %v666
      %v668 = vpop.f32.mrb[0].mxu0
      %v669 = vadd.f32 %v532, %v668
      %670 = vdwg.mxu0
      %v671 = vld [vmem:[%s361] sm:$0xff]
      %v672 = vld [vmem:[%s361 + $0x8] sm:$0xff]
      %v673 = vld [vmem:[%s361 + $0x10] sm:$0xff]
      %v674 = vld [vmem:[%s361 + $0x18] sm:$0xff]
      %v675 = vld [vmem:[%s361 + $0x20] sm:$0xff]
      %v676 = vld [vmem:[%s361 + $0x28] sm:$0xff]
      %v677 = vld [vmem:[%s361 + $0x30] sm:$0xff]
      %v678 = vld [vmem:[%s361 + $0x38] sm:$0xff]
      %s679 = scalar_lea.vmem %s4, 32
      %v680 = vld [vmem:[%s679] sm:$0xff]
      %v681 = vld [vmem:[%s679 + $0x8] sm:$0xff]
      %v683 = vsel %vm396, %v671, 0
      %v686 = vsel %vm396, %v672, 0
      %v689 = vsel %vm396, %v673, 0
      %v692 = vsel %vm396, %v674, 0
      %v695 = vsel %vm396, %v675, 0
      %v698 = vsel %vm396, %v676, 0
      %v701 = vsel %vm396, %v677, 0
      %v704 = vsel %vm396, %v678, 0
      %706 = vmatprep.subr.mxu0 %v681
      %707 = vmatpush1.msra.mxu0 %v680
      %708 = vmatprep.subr.mxu0 0.0
      %709 = vmatpush1.msra.mxu0 0.0
      %710 = vmatprep.subr.mxu0 0.0
      %711 = vmatpush1.msra.mxu0 0.0
      %712 = vmatprep.subr.mxu0 0.0
      %713 = vmatpush1.msra.mxu0 0.0
      %714 = vmatprep.subr.mxu0 0.0
      %715 = vmatpush1.msra.mxu0 0.0
      %716 = vmatprep.subr.mxu0 0.0
      %717 = vmatpush1.msra.mxu0 0.0
      %718 = vmatprep.subr.mxu0 0.0
      %719 = vmatpush1.msra.mxu0 0.0
      %720 = vmatprep.subr.mxu0 0.0
      %721 = vmatpush1.msra.mxu0 0.0
      %722 = vmatprep.subr.mxu0 0.0
      %723 = vmatpush1.msra.mxu0 0.0
      %724 = vmatprep.subr.mxu0 0.0
      %725 = vmatpush1.msra.mxu0 0.0
      %726 = vmatprep.subr.mxu0 0.0
      %727 = vmatpush1.msra.mxu0 0.0
      %728 = vmatprep.subr.mxu0 0.0
      %729 = vmatpush1.msra.mxu0 0.0
      %730 = vmatprep.subr.mxu0 0.0
      %731 = vmatpush1.msra.mxu0 0.0
      %732 = vmatprep.subr.mxu0 0.0
      %733 = vmatpush1.msra.mxu0 0.0
      %734 = vmatprep.subr.mxu0 0.0
      %735 = vmatpush1.msra.mxu0 0.0
      %736 = vmatprep.subr.mxu0 0.0
      %737 = vmatpush1.msra.mxu0 0.0
      %738 = vmatprep.subr.mxu0 0.0
      %739 = vmatpush1.msra.mxu0 0.0
      %740 = vmatprep.subr.mxu0 0.0
      %741 = vmatpush1.msra.mxu0 0.0
      %742 = vmatprep.subr.mxu0 0.0
      %743 = vmatpush1.msra.mxu0 0.0
      %744 = vmatprep.subr.mxu0 0.0
      %745 = vmatpush1.msra.mxu0 0.0
      %746 = vmatprep.subr.mxu0 0.0
      %747 = vmatpush1.msra.mxu0 0.0
      %748 = vmatprep.subr.mxu0 0.0
      %749 = vmatpush1.msra.mxu0 0.0
      %750 = vmatprep.subr.mxu0 0.0
      %751 = vmatpush1.msra.mxu0 0.0
      %752 = vmatprep.subr.mxu0 0.0
      %753 = vmatpush1.msra.mxu0 0.0
      %754 = vmatprep.subr.mxu0 0.0
      %755 = vmatpush1.msra.mxu0 0.0
      %756 = vmatprep.subr.mxu0 0.0
      %757 = vmatpush1.msra.mxu0 0.0
      %758 = vmatprep.subr.mxu0 0.0
      %759 = vmatpush1.msra.mxu0 0.0
      %760 = vmatprep.subr.mxu0 0.0
      %761 = vmatpush1.msra.mxu0 0.0
      %762 = vmatprep.subr.mxu0 0.0
      %763 = vmatpush1.msra.mxu0 0.0
      %764 = vmatprep.subr.mxu0 0.0
      %765 = vmatpush1.msra.mxu0 0.0
      %766 = vmatprep.subr.mxu0 0.0
      %767 = vmatpush1.msra.mxu0 0.0
      %768 = vmatprep.subr.mxu0 0.0
      %769 = vmatpush1.msra.mxu0 0.0
      %770 = vmatprep.mubr.f32.mxu0 0.0
      %771 = vmatmul.mubr.f32.gmra.mrb[0].mxu0 %v683
      %v772 = vpop.f32.mrb[0].mxu0
      %v773 = vadd.f32 0.0, %v772
      %v774 = vpop.f32.mrb[0].mxu0
      %v775 = vadd.f32 0.0, %v774
      %776 = vmatprep.mubr.f32.mxu0 0.0
      %777 = vmatmul.mubr.f32.gmra.mrb[0].mxu0 %v686
      %v778 = vpop.f32.mrb[0].mxu0
      %v779 = vadd.f32 0.0, %v778
      %v780 = vpop.f32.mrb[0].mxu0
      %v781 = vadd.f32 0.0, %v780
      %782 = vmatprep.mubr.f32.mxu0 0.0
      %783 = vmatmul.mubr.f32.gmra.mrb[0].mxu0 %v689
      %v784 = vpop.f32.mrb[0].mxu0
      %v785 = vadd.f32 0.0, %v784
      %v786 = vpop.f32.mrb[0].mxu0
      %v787 = vadd.f32 0.0, %v786
      %788 = vmatprep.mubr.f32.mxu0 0.0
      %789 = vmatmul.mubr.f32.gmra.mrb[0].mxu0 %v692
      %v790 = vpop.f32.mrb[0].mxu0
      %v791 = vadd.f32 0.0, %v790
      %v792 = vpop.f32.mrb[0].mxu0
      %v793 = vadd.f32 0.0, %v792
      %794 = vmatprep.mubr.f32.mxu0 0.0
      %795 = vmatmul.mubr.f32.gmra.mrb[0].mxu0 %v695
      %v796 = vpop.f32.mrb[0].mxu0
      %v797 = vadd.f32 0.0, %v796
      %v798 = vpop.f32.mrb[0].mxu0
      %v799 = vadd.f32 0.0, %v798
      %800 = vmatprep.mubr.f32.mxu0 0.0
      %801 = vmatmul.mubr.f32.gmra.mrb[0].mxu0 %v698
      %v802 = vpop.f32.mrb[0].mxu0
      %v803 = vadd.f32 0.0, %v802
      %v804 = vpop.f32.mrb[0].mxu0
      %v805 = vadd.f32 0.0, %v804
      %806 = vmatprep.mubr.f32.mxu0 0.0
      %807 = vmatmul.mubr.f32.gmra.mrb[0].mxu0 %v701
      %v808 = vpop.f32.mrb[0].mxu0
      %v809 = vadd.f32 0.0, %v808
      %v810 = vpop.f32.mrb[0].mxu0
      %v811 = vadd.f32 0.0, %v810
      %812 = vmatprep.mubr.f32.mxu0 0.0
      %813 = vmatmul.mubr.f32.gmra.mrb[0].mxu0 %v704
      %v814 = vpop.f32.mrb[0].mxu0
      %v815 = vadd.f32 0.0, %v814
      %v816 = vpop.f32.mrb[0].mxu0
      %v817 = vadd.f32 0.0, %v816
      %818 = vdwg.mxu0
      %v819 = vadd.f32 %v625, %v773
      %v820 = vadd.f32 %v627, %v775
      %v821 = vadd.f32 %v631, %v779
      %v822 = vadd.f32 %v633, %v781
      %v823 = vadd.f32 %v637, %v785
      %v824 = vadd.f32 %v639, %v787
      %v825 = vadd.f32 %v643, %v791
      %v826 = vadd.f32 %v645, %v793
      %v827 = vadd.f32 %v649, %v797
      %v828 = vadd.f32 %v651, %v799
      %v829 = vadd.f32 %v655, %v803
      %v830 = vadd.f32 %v657, %v805
      %v831 = vadd.f32 %v661, %v809
      %v832 = vadd.f32 %v663, %v811
      %v833 = vadd.f32 %v667, %v815
      %v834 = vadd.f32 %v669, %v817
      %v835 = vld [vmem:[%s367] sm:$0xff]
      %v836 = vld [vmem:[%s367 + $0x8] sm:$0xff]
      %v837 = vld [vmem:[%s367 + $0x10] sm:$0xff]
      %v838 = vld [vmem:[%s367 + $0x18] sm:$0xff]
      %v839 = vld [vmem:[%s367 + $0x20] sm:$0xff]
      %v840 = vld [vmem:[%s367 + $0x28] sm:$0xff]
      %v841 = vld [vmem:[%s367 + $0x30] sm:$0xff]
      %v842 = vld [vmem:[%s367 + $0x38] sm:$0xff]
      %s843 = scalar_lea.vmem %s4, 48
      %v844 = vld [vmem:[%s843] sm:$0xff]
      %v845 = vld [vmem:[%s843 + $0x8] sm:$0xff]
      %v847 = vsel %vm396, %v835, 0
      %v850 = vsel %vm396, %v836, 0
      %v853 = vsel %vm396, %v837, 0
      %v856 = vsel %vm396, %v838, 0
      %v859 = vsel %vm396, %v839, 0
      %v862 = vsel %vm396, %v840, 0
      %v865 = vsel %vm396, %v841, 0
      %v868 = vsel %vm396, %v842, 0
      %870 = vmatprep.subr.mxu0 %v845
      %871 = vmatpush1.msra.mxu0 %v844
      %872 = vmatprep.subr.mxu0 0.0
      %873 = vmatpush1.msra.mxu0 0.0
      %874 = vmatprep.subr.mxu0 0.0
      %875 = vmatpush1.msra.mxu0 0.0
      %876 = vmatprep.subr.mxu0 0.0
      %877 = vmatpush1.msra.mxu0 0.0
      %878 = vmatprep.subr.mxu0 0.0
      %879 = vmatpush1.msra.mxu0 0.0
      %880 = vmatprep.subr.mxu0 0.0
      %881 = vmatpush1.msra.mxu0 0.0
      %882 = vmatprep.subr.mxu0 0.0
      %883 = vmatpush1.msra.mxu0 0.0
      %884 = vmatprep.subr.mxu0 0.0
      %885 = vmatpush1.msra.mxu0 0.0
      %886 = vmatprep.subr.mxu0 0.0
      %887 = vmatpush1.msra.mxu0 0.0
      %888 = vmatprep.subr.mxu0 0.0
      %889 = vmatpush1.msra.mxu0 0.0
      %890 = vmatprep.subr.mxu0 0.0
      %891 = vmatpush1.msra.mxu0 0.0
      %892 = vmatprep.subr.mxu0 0.0
      %893 = vmatpush1.msra.mxu0 0.0
      %894 = vmatprep.subr.mxu0 0.0
      %895 = vmatpush1.msra.mxu0 0.0
      %896 = vmatprep.subr.mxu0 0.0
      %897 = vmatpush1.msra.mxu0 0.0
      %898 = vmatprep.subr.mxu0 0.0
      %899 = vmatpush1.msra.mxu0 0.0
      %900 = vmatprep.subr.mxu0 0.0
      %901 = vmatpush1.msra.mxu0 0.0
      %902 = vmatprep.subr.mxu0 0.0
      %903 = vmatpush1.msra.mxu0 0.0
      %904 = vmatprep.subr.mxu0 0.0
      %905 = vmatpush1.msra.mxu0 0.0
      %906 = vmatprep.subr.mxu0 0.0
      %907 = vmatpush1.msra.mxu0 0.0
      %908 = vmatprep.subr.mxu0 0.0
      %909 = vmatpush1.msra.mxu0 0.0
      %910 = vmatprep.subr.mxu0 0.0
      %911 = vmatpush1.msra.mxu0 0.0
      %912 = vmatprep.subr.mxu0 0.0
      %913 = vmatpush1.msra.mxu0 0.0
      %914 = vmatprep.subr.mxu0 0.0
      %915 = vmatpush1.msra.mxu0 0.0
      %916 = vmatprep.subr.mxu0 0.0
      %917 = vmatpush1.msra.mxu0 0.0
      %918 = vmatprep.subr.mxu0 0.0
      %919 = vmatpush1.msra.mxu0 0.0
      %920 = vmatprep.subr.mxu0 0.0
      %921 = vmatpush1.msra.mxu0 0.0
      %922 = vmatprep.subr.mxu0 0.0
      %923 = vmatpush1.msra.mxu0 0.0
      %924 = vmatprep.subr.mxu0 0.0
      %925 = vmatpush1.msra.mxu0 0.0
      %926 = vmatprep.subr.mxu0 0.0
      %927 = vmatpush1.msra.mxu0 0.0
      %928 = vmatprep.subr.mxu0 0.0
      %929 = vmatpush1.msra.mxu0 0.0
      %930 = vmatprep.subr.mxu0 0.0
      %931 = vmatpush1.msra.mxu0 0.0
      %932 = vmatprep.subr.mxu0 0.0
      %933 = vmatpush1.msra.mxu0 0.0
      %934 = vmatprep.mubr.f32.mxu0 0.0
      %935 = vmatmul.mubr.f32.gmra.mrb[0].mxu0 %v847
      %v936 = vpop.f32.mrb[0].mxu0
      %v937 = vadd.f32 0.0, %v936
      %v938 = vpop.f32.mrb[0].mxu0
      %v939 = vadd.f32 0.0, %v938
      %940 = vmatprep.mubr.f32.mxu0 0.0
      %941 = vmatmul.mubr.f32.gmra.mrb[0].mxu0 %v850
      %v942 = vpop.f32.mrb[0].mxu0
      %v943 = vadd.f32 0.0, %v942
      %v944 = vpop.f32.mrb[0].mxu0
      %v945 = vadd.f32 0.0, %v944
      %946 = vmatprep.mubr.f32.mxu0 0.0
      %947 = vmatmul.mubr.f32.gmra.mrb[0].mxu0 %v853
      %v948 = vpop.f32.mrb[0].mxu0
      %v949 = vadd.f32 0.0, %v948
      %v950 = vpop.f32.mrb[0].mxu0
      %v951 = vadd.f32 0.0, %v950
      %952 = vmatprep.mubr.f32.mxu0 0.0
      %953 = vmatmul.mubr.f32.gmra.mrb[0].mxu0 %v856
      %v954 = vpop.f32.mrb[0].mxu0
      %v955 = vadd.f32 0.0, %v954
      %v956 = vpop.f32.mrb[0].mxu0
      %v957 = vadd.f32 0.0, %v956
      %958 = vmatprep.mubr.f32.mxu0 0.0
      %959 = vmatmul.mubr.f32.gmra.mrb[0].mxu0 %v859
      %v960 = vpop.f32.mrb[0].mxu0
      %v961 = vadd.f32 0.0, %v960
      %v962 = vpop.f32.mrb[0].mxu0
      %v963 = vadd.f32 0.0, %v962
      %964 = vmatprep.mubr.f32.mxu0 0.0
      %965 = vmatmul.mubr.f32.gmra.mrb[0].mxu0 %v862
      %v966 = vpop.f32.mrb[0].mxu0
      %v967 = vadd.f32 0.0, %v966
      %v968 = vpop.f32.mrb[0].mxu0
      %v969 = vadd.f32 0.0, %v968
      %970 = vmatprep.mubr.f32.mxu0 0.0
      %971 = vmatmul.mubr.f32.gmra.mrb[0].mxu0 %v865
      %v972 = vpop.f32.mrb[0].mxu0
      %v973 = vadd.f32 0.0, %v972
      %v974 = vpop.f32.mrb[0].mxu0
      %v975 = vadd.f32 0.0, %v974
      %976 = vmatprep.mubr.f32.mxu0 0.0
      %977 = vmatmul.mubr.f32.gmra.mrb[0].mxu0 %v868
      %v978 = vpop.f32.mrb[0].mxu0
      %v979 = vadd.f32 0.0, %v978
      %v980 = vpop.f32.mrb[0].mxu0
      %v981 = vadd.f32 0.0, %v980
      %982 = vdwg.mxu0
      %v983 = vadd.f32 %v819, %v937
      %v984 = vadd.f32 %v820, %v939
      %v985 = vadd.f32 %v821, %v943
      %v986 = vadd.f32 %v822, %v945
      %v987 = vadd.f32 %v823, %v949
      %v988 = vadd.f32 %v824, %v951
      %v989 = vadd.f32 %v825, %v955
      %v990 = vadd.f32 %v826, %v957
      %v991 = vadd.f32 %v827, %v961
      %v992 = vadd.f32 %v828, %v963
      %v993 = vadd.f32 %v829, %v967
      %v994 = vadd.f32 %v830, %v969
      %v995 = vadd.f32 %v831, %v973
      %v996 = vadd.f32 %v832, %v975
      %v997 = vadd.f32 %v833, %v979
      %v998 = vadd.f32 %v834, %v981
      %v999 = vld [vmem:[%s5] sm:$0x3]
      %v1001 = vlaneseq
      %v1002 = vshrl.u32 %v1001, 7
      %v1003 = vsub.s32 0, %v1002
      %v1004 = vrot.slane %v999, %v1003
      %v1005 = vlaneseq
      %v1006 = vshrl.u32 %v1005, 7
      %v1007 = vsub.s32 1, %v1006
      %v1008 = vrot.slane %v999, %v1007
      %v1011 = vadd.f32 %v983, %v1004
      %v1012 = vadd.f32 %v984, %v1008
      %v1013 = vadd.f32 %v985, %v1004
      %v1014 = vadd.f32 %v986, %v1008
      %v1015 = vadd.f32 %v987, %v1004
      %v1016 = vadd.f32 %v988, %v1008
      %v1017 = vadd.f32 %v989, %v1004
      %v1018 = vadd.f32 %v990, %v1008
      %v1019 = vadd.f32 %v991, %v1004
      %v1020 = vadd.f32 %v992, %v1008
      %v1021 = vadd.f32 %v993, %v1004
      %v1022 = vadd.f32 %v994, %v1008
      %v1023 = vadd.f32 %v995, %v1004
      %v1024 = vadd.f32 %v996, %v1008
      %v1025 = vadd.f32 %v997, %v1004
      %v1026 = vadd.f32 %v998, %v1008
      %v1027 = vmax.f32 %v1011, 0.0
      %v1028 = vmax.f32 %v1012, 0.0
      %v1029 = vmax.f32 %v1013, 0.0
      %v1030 = vmax.f32 %v1014, 0.0
      %v1031 = vmax.f32 %v1015, 0.0
      %v1032 = vmax.f32 %v1016, 0.0
      %v1033 = vmax.f32 %v1017, 0.0
      %v1034 = vmax.f32 %v1018, 0.0
      %v1035 = vmax.f32 %v1019, 0.0
      %v1036 = vmax.f32 %v1020, 0.0
      %v1037 = vmax.f32 %v1021, 0.0
      %v1038 = vmax.f32 %v1022, 0.0
      %v1039 = vmax.f32 %v1023, 0.0
      %v1040 = vmax.f32 %v1024, 0.0
      %v1041 = vmax.f32 %v1025, 0.0
      %v1042 = vmax.f32 %v1026, 0.0
      %v1043 = vld [vmem:[%s6] sm:$0xff]
      %v1044 = vld [vmem:[%s6 + $0x8] sm:$0xff]
      %v1045 = vld [vmem:[%s6 + $0x10] sm:$0xff]
      %v1046 = vld [vmem:[%s6 + $0x18] sm:$0xff]
      %v1047 = vld [vmem:[%s6 + $0x20] sm:$0xff]
      %v1048 = vld [vmem:[%s6 + $0x28] sm:$0xff]
      %v1049 = vld [vmem:[%s6 + $0x30] sm:$0xff]
      %v1050 = vld [vmem:[%s6 + $0x38] sm:$0xff]
      %v1051 = vld [vmem:[%s6 + $0x40] sm:$0xff]
      %v1052 = vld [vmem:[%s6 + $0x48] sm:$0xff]
      %v1053 = vld [vmem:[%s6 + $0x50] sm:$0xff]
      %v1054 = vld [vmem:[%s6 + $0x58] sm:$0xff]
      %v1055 = vld [vmem:[%s6 + $0x60] sm:$0xff]
      %v1056 = vld [vmem:[%s6 + $0x68] sm:$0xff]
      %v1057 = vld [vmem:[%s6 + $0x70] sm:$0xff]
      %v1058 = vld [vmem:[%s6 + $0x78] sm:$0xff]
      %v1059 = vld [vmem:[%s6 + $0x80] sm:$0xff]
      %v1060 = vld [vmem:[%s6 + $0x88] sm:$0xff]
      %v1061 = vld [vmem:[%s6 + $0x90] sm:$0xff]
      %v1062 = vld [vmem:[%s6 + $0x98] sm:$0xff]
      %v1063 = vld [vmem:[%s7] sm:$0x1]
      %v1065 = vlaneseq
      %v1066 = vshrl.u32 %v1065, 7
      %v1067 = vsub.s32 0, %v1066
      %v1068 = vrot.slane %v1063, %v1067
      %vm1070 = vcmask 261120
      %v1072 = vsel %vm1070, %v1028, 0
      %v1075 = vsel %vm1070, %v1030, 0
      %v1078 = vsel %vm1070, %v1032, 0
      %v1081 = vsel %vm1070, %v1034, 0
      %v1084 = vsel %vm1070, %v1036, 0
      %v1087 = vsel %vm1070, %v1038, 0
      %v1090 = vsel %vm1070, %v1040, 0
      %v1093 = vsel %vm1070, %v1042, 0
      %1095 = vmatprep.subr.mxu0 0.0
      %1096 = vmatpush1.msra.mxu0 %v1043
      %1097 = vmatprep.subr.mxu0 0.0
      %1098 = vmatpush1.msra.mxu0 %v1044
      %1099 = vmatprep.subr.mxu0 0.0
      %1100 = vmatpush1.msra.mxu0 %v1045
      %1101 = vmatprep.subr.mxu0 0.0
      %1102 = vmatpush1.msra.mxu0 %v1046
      %1103 = vmatprep.subr.mxu0 0.0
      %1104 = vmatpush1.msra.mxu0 %v1047
      %1105 = vmatprep.subr.mxu0 0.0
      %1106 = vmatpush1.msra.mxu0 %v1048
      %1107 = vmatprep.subr.mxu0 0.0
      %1108 = vmatpush1.msra.mxu0 %v1049
      %1109 = vmatprep.subr.mxu0 0.0
      %1110 = vmatpush1.msra.mxu0 %v1050
      %1111 = vmatprep.subr.mxu0 0.0
      %1112 = vmatpush1.msra.mxu0 %v1051
      %1113 = vmatprep.subr.mxu0 0.0
      %1114 = vmatpush1.msra.mxu0 %v1052
      %1115 = vmatprep.subr.mxu0 0.0
      %1116 = vmatpush1.msra.mxu0 %v1053
      %1117 = vmatprep.subr.mxu0 0.0
      %1118 = vmatpush1.msra.mxu0 %v1054
      %1119 = vmatprep.subr.mxu0 0.0
      %1120 = vmatpush1.msra.mxu0 %v1055
      %1121 = vmatprep.subr.mxu0 0.0
      %1122 = vmatpush1.msra.mxu0 %v1056
      %1123 = vmatprep.subr.mxu0 0.0
      %1124 = vmatpush1.msra.mxu0 %v1057
      %1125 = vmatprep.subr.mxu0 0.0
      %1126 = vmatpush1.msra.mxu0 %v1058
      %1127 = vmatprep.subr.mxu0 0.0
      %1128 = vmatpush1.msra.mxu0 %v1059
      %1129 = vmatprep.subr.mxu0 0.0
      %1130 = vmatpush1.msra.mxu0 %v1060
      %1131 = vmatprep.subr.mxu0 0.0
      %1132 = vmatpush1.msra.mxu0 %v1061
      %1133 = vmatprep.subr.mxu0 0.0
      %1134 = vmatpush1.msra.mxu0 %v1062
      %1135 = vmatprep.subr.mxu0 0.0
      %1136 = vmatpush1.msra.mxu0 0.0
      %1137 = vmatprep.subr.mxu0 0.0
      %1138 = vmatpush1.msra.mxu0 0.0
      %1139 = vmatprep.subr.mxu0 0.0
      %1140 = vmatpush1.msra.mxu0 0.0
      %1141 = vmatprep.subr.mxu0 0.0
      %1142 = vmatpush1.msra.mxu0 0.0
      %1143 = vmatprep.subr.mxu0 0.0
      %1144 = vmatpush1.msra.mxu0 0.0
      %1145 = vmatprep.subr.mxu0 0.0
      %1146 = vmatpush1.msra.mxu0 0.0
      %1147 = vmatprep.subr.mxu0 0.0
      %1148 = vmatpush1.msra.mxu0 0.0
      %1149 = vmatprep.subr.mxu0 0.0
      %1150 = vmatpush1.msra.mxu0 0.0
      %1151 = vmatprep.subr.mxu0 0.0
      %1152 = vmatpush1.msra.mxu0 0.0
      %1153 = vmatprep.subr.mxu0 0.0
      %1154 = vmatpush1.msra.mxu0 0.0
      %1155 = vmatprep.subr.mxu0 0.0
      %1156 = vmatpush1.msra.mxu0 0.0
      %1157 = vmatprep.subr.mxu0 0.0
      %1158 = vmatpush1.msra.mxu0 0.0
      %1159 = vmatprep.mubr.f32.mxu0 %v1072
      %1160 = vmatmul.mubr.f32.gmra.mrb[0].mxu0 %v1027
      %v1161 = vpop.f32.mrb[0].mxu0
      %v1162 = vadd.f32 %v1068, %v1161
      %v1163 = vpop.f32.mrb[0].mxu0
      %1164 = vmatprep.mubr.f32.mxu0 %v1075
      %1165 = vmatmul.mubr.f32.gmra.mrb[0].mxu0 %v1029
      %v1166 = vpop.f32.mrb[0].mxu0
      %v1167 = vadd.f32 %v1068, %v1166
      %v1168 = vpop.f32.mrb[0].mxu0
      %1169 = vmatprep.mubr.f32.mxu0 %v1078
      %1170 = vmatmul.mubr.f32.gmra.mrb[0].mxu0 %v1031
      %v1171 = vpop.f32.mrb[0].mxu0
      %v1172 = vadd.f32 %v1068, %v1171
      %v1173 = vpop.f32.mrb[0].mxu0
      %1174 = vmatprep.mubr.f32.mxu0 %v1081
      %1175 = vmatmul.mubr.f32.gmra.mrb[0].mxu0 %v1033
      %v1176 = vpop.f32.mrb[0].mxu0
      %v1177 = vadd.f32 %v1068, %v1176
      %v1178 = vpop.f32.mrb[0].mxu0
      %1179 = vmatprep.mubr.f32.mxu0 %v1084
      %1180 = vmatmul.mubr.f32.gmra.mrb[0].mxu0 %v1035
      %v1181 = vpop.f32.mrb[0].mxu0
      %v1182 = vadd.f32 %v1068, %v1181
      %v1183 = vpop.f32.mrb[0].mxu0
      %1184 = vmatprep.mubr.f32.mxu0 %v1087
      %1185 = vmatmul.mubr.f32.gmra.mrb[0].mxu0 %v1037
      %v1186 = vpop.f32.mrb[0].mxu0
      %v1187 = vadd.f32 %v1068, %v1186
      %v1188 = vpop.f32.mrb[0].mxu0
      %1189 = vmatprep.mubr.f32.mxu0 %v1090
      %1190 = vmatmul.mubr.f32.gmra.mrb[0].mxu0 %v1039
      %v1191 = vpop.f32.mrb[0].mxu0
      %v1192 = vadd.f32 %v1068, %v1191
      %v1193 = vpop.f32.mrb[0].mxu0
      %1194 = vmatprep.mubr.f32.mxu0 %v1093
      %1195 = vmatmul.mubr.f32.gmra.mrb[0].mxu0 %v1041
      %v1196 = vpop.f32.mrb[0].mxu0
      %v1197 = vadd.f32 %v1068, %v1196
      %v1198 = vpop.f32.mrb[0].mxu0
      %1199 = vdwg.mxu0
      %vm1200 = vcmask 39936
      %1201 = vst.msk [vmem:[%s373] sm:$0xff] %vm1200, %v1162
      %1202 = vst.msk [vmem:[%s373 + $0x8] sm:$0xff] %vm1200, %v1167
      %1203 = vst.msk [vmem:[%s373 + $0x10] sm:$0xff] %vm1200, %v1172
      %1204 = vst.msk [vmem:[%s373 + $0x18] sm:$0xff] %vm1200, %v1177
      %1205 = vst.msk [vmem:[%s373 + $0x20] sm:$0xff] %vm1200, %v1182
      %1206 = vst.msk [vmem:[%s373 + $0x28] sm:$0xff] %vm1200, %v1187
      %1207 = vst.msk [vmem:[%s373 + $0x30] sm:$0xff] %vm1200, %v1192
      %1208 = vst.msk [vmem:[%s373 + $0x38] sm:$0xff] %vm1200, %v1197
      %s1209 = smul.u32 8, %s19
      %p1210 = scmp.lt.s32.totalorder %s1209, 15
      %s1211 = scalar_select %p1210, %s1209, 15
      %s1212 = smul.addr %s1211, 8
      %s1213 = scalar_lea.vmem %s8, %s1212
      // Predicated region
      $region53: #{tpu_custom_call.1} parent=51 // pred_check
        %p1214 = pneg %p225
      $region54: #{tpu_custom_call.1} parent=51 // pred_check_branch
        %1216 = sbr.rel (%p1214) target = $region56
      $region55: #{tpu_custom_call.1} parent=51 // pred_region
        %s1217 = smul.u32 8, %s19
      $region56: #{tpu_custom_call.1} parent=51 // pred_fallthru
        _
    $region52: #{tpu_custom_call.1} parent=5 // pred_fallthru
      _
    %p1218 = scmp.le.s32.totalorder 2, %s14
    // Predicated region
    $region57: #{tpu_custom_call.1} parent=5 // pred_check
      %p1219 = pneg %p1218
    $region58: #{tpu_custom_call.1} parent=5 // pred_check_branch
      %1221 = sbr.rel (%p1219) target = $region60
    $region59: #{tpu_custom_call.1} parent=5 // pred_region
      %s1222 = ssub.s32 %s14, 2
      // Predicated region
      $region61: #{tpu_custom_call.1} parent=59 // pred_check
        %p1223 = pneg %p231
      $region62: #{tpu_custom_call.1} parent=59 // pred_check_branch
        %1225 = sbr.rel (%p1223) target = $region64
      $region63: #{tpu_custom_call.1} parent=59 // pred_region
        %s1226 = smul.u32 8, %s20
        %p1227 = scmp.lt.s32.totalorder %s1226, 15
        %s1228 = scalar_select %p1227, %s1226, 15
        %s1229 = smul.addr %s1228, 8
        %s1230 = scalar_lea.vmem %s8, %s1229
      $region64: #{tpu_custom_call.1} parent=59 // pred_fallthru
        _
    $region60: #{tpu_custom_call.1} parent=5 // pred_fallthru
      _
  $region6: #{tpu_custom_call.1} parent=0 // loop_footer
    %s18 = sadd.s32 1, %s14
  $region7: #{tpu_custom_call.1} parent=0 // loop_footer_branch
    %13 = sbr.rel target = $region3
  $region8: #{tpu_custom_call.1} parent=0 // loop_exit
    _

</llo_original>
